<compile_context>
chip_gen: v7x
topology: tpu7x:2x2x1
jax: 0.10.0
libtpu: 0.0.40
codegen_flags: <defaults>
</compile_context>

<pallas_src>
import math

import jax
import jax.numpy as jnp
from jax.experimental import pallas as pl
from jax.experimental.pallas import tpu as pltpu


def _round_up(x, m):
    return -(-x // m) * m


def _periodic_broadcast_kernel(src_ref, o_ref):
    """Fill the output tile with a sublane-periodic repetition of src.

    src_ref: (P, L) pattern tile (P == 1 -> plain row broadcast).
    o_ref:   (TR, L) output tile; row r becomes src_ref[r % P].  The wrapper
             guarantees TR % P == 0 whenever the grid has more than one step,
             so the pattern stays aligned at every block offset.
    """
    p = src_ref.shape[0]
    tr = o_ref.shape[0]
    if p == 1:
        o_ref[...] = jnp.broadcast_to(src_ref[...], o_ref.shape)
    elif tr % p == 0:
        o_ref[...] = jnp.tile(src_ref[...], (tr // p, 1))
    else:
        # Single full-extent block only (offset 0); static over-tile + slice.
        o_ref[...] = jnp.tile(src_ref[...], (-(-tr // p), 1))[:tr]


def two_cell_embedding(x, weight, *, min_pallas_bytes=1 << 20):
    """x: (N, 1) int indices (contents unused, zeroed-index contract);
    weight: (E, D) embedding table  ->  (N, D) = broadcast of weight[0]."""
    n = int(x.shape[0])
    d = int(weight.shape[1])
    dtype = weight.dtype
    itemsize = jnp.dtype(dtype).itemsize

    # ---- Small / empty outputs: plain XLA broadcast beats a Pallas launch.
    if n == 0 or n * d * itemsize < min_pallas_bytes:
        return jnp.broadcast_to(weight[0], (n, d))

    # ---- Generation-aware block budget.  Output is double-buffered, so keep
    # 2*block (+ tiny pattern input) comfortably inside scoped VMEM
    # (v5e 16 MiB default / 128 MiB phys, v6e 32/128, v7x 32/64).
    try:
        vmem_cap = int(getattr(pltpu.get_tpu_info(), "vmem_capacity_bytes",
                               64 << 20))
    except Exception:
        vmem_cap = 64 << 20                       # conservative (v7x per-TC)
    max_block_bytes = min(12 << 20, vmem_cap // 8)

    # Native sublane packing for the dtype (f32: 8, bf16: 16, int8/fp8: 32).
    sublane = 8 * max(1, 4 // itemsize)

    # ---- Layout: lane-dense output always.
    lane_pack = (d % 128) != 0
    if lane_pack:
        period_elems = math.lcm(d, 128)
        p = period_elems // 128                   # pattern period in slab rows
        lanes = 128
        rows = -(-(n * d) // 128)                 # padded tail sliced off below
        src = jnp.tile(weight[0:1, :], (1, period_elems // d)).reshape(p, 128)
    else:
        p = 1
        lanes = d
        rows = n
        src = weight[0:1, :]                      # only row 0 is ever read

    bytes_per_row = lanes * itemsize
    if bytes_per_row > max_block_bytes:
        # TODO(synk): absurdly wide D (> block budget per row) is not a real
        # embedding-dim regime; keep the XLA broadcast rather than column-tile.
        return jnp.broadcast_to(weight[0], (n, d))

    # ---- Row-tile sizing: max_block_bytes is the sole governor; align to the
    # sublane packing and the pattern period.
    align = math.lcm(sublane, p)
    if rows <= align:
        tr = rows                                 # single full-extent block
    else:
        tr = min(rows, max(align, max_block_bytes // bytes_per_row))
        tr = max(align, (tr // align) * align)
        # Keep >= 2 grid steps so v7x's two TensorCores both get writeback
        # work ("parallel" axis); costs only one extra ~0.35 us step elsewhere.
        if tr >= rows and rows >= 2 * align:
            tr = _round_up(-(-rows // 2), align)

    grid = (pl.cdiv(rows, tr),)

    # ---- Scoped-VMEM limit: double-buffered output + (tiny) pattern input.
    block_bytes = _round_up(tr, sublane) * _round_up(lanes, 128) * itemsize
    src_bytes = (_round_up(src.shape[0], sublane)
                 * _round_up(src.shape[1], 128) * itemsize)
    needed = 2 * block_bytes + 2 * src_bytes + (2 << 20)
    vmem_limit = int(min(max(needed, 16 << 20), vmem_cap // 2))

    out_flat = pl.pallas_call(
        _periodic_broadcast_kernel,
        out_shape=jax.ShapeDtypeStruct((rows, lanes), dtype),
        grid_spec=pltpu.PrefetchScalarGridSpec(
            num_scalar_prefetch=0,
            grid=grid,
            in_specs=[pl.BlockSpec((src.shape[0], lanes), lambda i: (0, 0))],
            out_specs=pl.BlockSpec((tr, lanes), lambda i: (i, 0)),
        ),
        compiler_params=pltpu.CompilerParams(
            dimension_semantics=("parallel",),
            vmem_limit_bytes=vmem_limit,
        ),
    )(src)

    if lane_pack:
        return out_flat.reshape(-1)[: n * d].reshape(n, d)
    return out_flat


if __name__ == "__main__":
    key = jax.random.PRNGKey(0)
    k_w, k_x, k_w2, k_w3 = jax.random.split(key, 4)

    # Module-scale shapes: N 2-cells with an (N, 1) rank tensor, embedding_dim D.
    num_embeddings, embedding_dim, n = 16, 32, 8
    weight = jax.random.normal(k_w, (num_embeddings, embedding_dim),
                               dtype=jnp.float32)
    x = jax.random.randint(k_x, (n, 1), 0, num_embeddings, dtype=jnp.int32)
    ref = jnp.broadcast_to(weight[0], (n, embedding_dim))

    # 1) Real module regime -> small-output fast path (plain XLA broadcast).
    out = two_cell_embedding(x, weight)
    jax.block_until_ready(out)
    assert out.shape == (n, embedding_dim)
    assert jnp.allclose(out, ref, atol=1e-6), "mismatch (fast path)"

    # 2) Same small shapes forced through the Pallas lane-packed path (P = 1).
    out_p = two_cell_embedding(x, weight, min_pallas_bytes=0)
    jax.block_until_ready(out_p)
    assert jnp.allclose(out_p, ref, atol=1e-6), "mismatch (lane-packed, P=1)"

    # 3) Awkward D = 48 (P = 3 periodic pattern, multi-block grid).
    n3, d3 = 256, 48
    weight3 = jax.random.normal(k_w3, (8, d3), dtype=jnp.float32)
    x3 = jnp.zeros((n3, 1), dtype=jnp.int32)
    out3 = two_cell_embedding(x3, weight3, min_pallas_bytes=0)
    jax.block_until_ready(out3)
    assert jnp.allclose(out3, jnp.broadcast_to(weight3[0], (n3, d3)),
                        atol=1e-6), "mismatch (periodic P=3 path)"

    # 4) D already a multiple of 128 (direct lane-dense path, 2 grid steps).
    n2, d2 = 16, 128
    weight2 = jax.random.normal(k_w2, (4, d2), dtype=jnp.float32)
    x2 = jnp.zeros((n2, 1), dtype=jnp.int32)
    out2 = two_cell_embedding(x2, weight2, min_pallas_bytes=0)
    jax.block_until_ready(out2)
    assert jnp.allclose(out2, jnp.broadcast_to(weight2[0], (n2, d2)),
                        atol=1e-6), "mismatch (direct path)"

    print("KERNEL_OK")
</pallas_src>

<mosaic_0001>
module attributes {stable_mosaic.version = 11 : i64} {
  func.func @_periodic_broadcast_kernel(%arg0: i32, %arg1: memref<1x128xf32, #tpu.memory_space<vmem>>, %arg2: memref<2x128xf32, #tpu.memory_space<vmem>>) attributes {dimension_semantics = [#tpu.dimension_semantics<parallel>], iteration_bounds = array<i64: 1>, scalar_prefetch = 0 : i64, scratch_operands = 0 : i64, tpu.core_type = #tpu.core_type<tc>, window_params = [{pipeline_mode = #tpu.pipeline_mode<synchronous>, transform_indices = @transform_0, window_bounds = array<i64: 1, 128>}, {transform_indices = @transform_1, window_bounds = array<i64: 2, 128>}]} {
    %c0 = arith.constant 0 : index
    %c0_0 = arith.constant 0 : index
    %0 = vector.load %arg1[%c0, %c0_0] : memref<1x128xf32, #tpu.memory_space<vmem>>, vector<1x128xf32>
    %1 = vector.shape_cast %0 : vector<1x128xf32> to vector<1x128xf32>
    %2 = vector.broadcast %1 : vector<1x128xf32> to vector<2x128xf32>
    %c0_1 = arith.constant 0 : index
    %c0_2 = arith.constant 0 : index
    %3 = vector.load %arg2[%c0_1, %c0_2] : memref<2x128xf32, #tpu.memory_space<vmem>>, vector<2x128xf32>
    tpu.vector_store %arg2[%c0_1, %c0_2], %2 {strides = array<i32>} : memref<2x128xf32, #tpu.memory_space<vmem>>, vector<2x128xf32>,
    return
  }
  func.func @transform_0(%arg0: i32) -> (i32, i32) {
    %c0_i32 = arith.constant 0 : i32
    %c0_i32_0 = arith.constant 0 : i32
    %c0_i32_1 = arith.constant 0 : i32
    return %c0_i32, %c0_i32_0 : i32, i32
  }
  func.func @transform_1(%arg0: i32) -> (i32, i32) {
    %c0_i32 = arith.constant 0 : i32
    %c0_i32_0 = arith.constant 0 : i32
    return %arg0, %c0_i32 : i32, i32
  }
}

</mosaic_0001>

<llo_original>
// kernel: tpu_custom_call.1
$region0: #{tpu_custom_call.1}
  #allocation0 [shape = 'u32[]', space=smem, size = 0x4, offset = 0x4, fixed_abs, tag = 'smem constant byte address 0x4 - core index']
  #allocation1 [shape = 'u32[144,128]{1,0:T(1,128)}', space=vmem, size = 0x12000, scoped, tag = 'internal scratch']
  %s0 = inlined_call_operand.hbm [shape: f32[1,128], index: 0, kind: input, shape index: {}]
  %s1 = inlined_call_operand.hbm [shape: f32[2,128], index: 1, kind: output, shape index: {}]
  %s2 = sld [smem:[#allocation0]]
  $region18: #{tpu_custom_call.1} parent=0
    _
  %s4 = ssub.s32 1, %s2
  %s5 = scalar_select 0, %s4, %s2
  $region1: #{tpu_custom_call.1} parent=0
    #allocation2 [shape = 'u8[512]{0}', space=vmem, size = 0x400, scoped, tag = 'input window, operand 0, single buffered']
    #allocation3 [shape = 's32[1]{0}', space=sflag, size = 0x4, scoped, tag = 'scoped memory for tpu_custom_call.1']
    #allocation4 [shape = 's32[1]{0}', space=sflag, size = 0x4, scoped, tag = 'scoped memory for tpu_custom_call.1']
    #allocation5 [shape = 'u8[1024]{0}', space=vmem, size = 0x400, scoped, tag = 'output window, operand 0, single buffered']
    %6 = vsyncpa [#allocation3], 0
    %7 = vsyncpa [#allocation4], 0
    // Predicated region
    $region2: #{tpu_custom_call.1} parent=1 // pred_check
      _
    $region3: #{tpu_custom_call.1} parent=1 // pred_check_branch
      %9 = sbr.rel (0) target = $region5
    $region4: #{tpu_custom_call.1} parent=1 // pred_region
      %s11 = ssub.s32 16, 16
      %12 = vsyncadd [#allocation3], %s11
      %s14 = sshll.u32 [#allocation2], 4
      %s15 = int_to_ptr.vmem [resolvable:$true] %s14
      %17 = dma.hbm_to_vmem [thread:$0]  %s0, 16, %s15, [#allocation3]
    $region5: #{tpu_custom_call.1} parent=1 // pred_fallthru
      _
    // Predicated region
    $region6: #{tpu_custom_call.1} parent=1 // pred_check
      _
    $region7: #{tpu_custom_call.1} parent=1 // pred_check_branch
      %19 = sbr.rel (0) target = $region9
    $region8: #{tpu_custom_call.1} parent=1 // pred_region
      %20 = dma.done [#allocation3], 16
    $region9: #{tpu_custom_call.1} parent=1 // pred_fallthru
      _
    %v21 = vld [vmem:[#allocation2] sm:$0x1]
    %v23 = vlaneseq
    %v24 = vshrl.u32 %v23, 7
    %v25 = vsub.s32 0, %v24
    %v26 = vrot.slane %v21, %v25
    %28 = vst [vmem:[#allocation5] sm:$0x3] %v26
    // Predicated region
    $region10: #{tpu_custom_call.1} parent=1 // pred_check
      _
    $region11: #{tpu_custom_call.1} parent=1 // pred_check_branch
      %30 = sbr.rel (0) target = $region13
    $region12: #{tpu_custom_call.1} parent=1 // pred_region
      %s32 = ssub.s32 32, 32
      %33 = vsyncadd [#allocation4], %s32
      %s35 = sshll.u32 [#allocation5], 4
      %s36 = int_to_ptr.vmem [resolvable:$true] %s35
      %38 = dma.vmem_to_hbm [thread:$0]  %s36, 32, %s1, [#allocation4]
    $region13: #{tpu_custom_call.1} parent=1 // pred_fallthru
      _
    // Predicated region
    $region14: #{tpu_custom_call.1} parent=1 // pred_check
      _
    $region15: #{tpu_custom_call.1} parent=1 // pred_check_branch
      %40 = sbr.rel (0) target = $region17
    $region16: #{tpu_custom_call.1} parent=1 // pred_region
      %41 = dma.done [#allocation4], 32
    $region17: #{tpu_custom_call.1} parent=1 // pred_fallthru
      _
    %42 = vsyncpa [#allocation3], 1
    %43 = vsyncpa [#allocation4], 1

</llo_original>
